<compile_context>
chip_gen: v7x
topology: tpu7x:2x2x1
jax: 0.10.0
libtpu: 0.0.40
codegen_flags: <defaults>
</compile_context>

<pallas_src>
import functools

import jax
import jax.numpy as jnp
from jax.experimental import pallas as pl
from jax.experimental.pallas import tpu as pltpu

LN_EPS = 1e-5


def _round_up(x, m):
    return (x + m - 1) // m * m


def _vmem_budget_bytes():
    """~81% of physical VMEM (headroom for Mosaic scratch / spills)."""
    cap = 64 * 1024 * 1024  # conservative fallback = v7x per-TC VMEM
    try:
        cap = int(pltpu.get_tpu_info().vmem_capacity_bytes)
    except Exception:
        pass
    return (cap * 13) // 16


def _largest_divisor_tile(total, target, unit=128):
    """Largest multiple of `unit` that divides `total` and is <= target (>= unit)."""
    n = total // unit
    best = 1
    for d in range(1, n + 1):
        if n % d == 0 and d * unit <= target:
            best = d
    return best * unit


# ----------------------------------------------------------------------------- kernels
def _linear_relu_ln_kernel_1k(x_ref, w_ref, b_ref, g_ref, be_ref, o_ref, *, inv_out):
    """Whole reduction in one block: no accumulator scratch."""
    y = jnp.dot(x_ref[...], w_ref[...], preferred_element_type=jnp.float32)
    y = jnp.maximum(y + b_ref[...], 0.0)                     # bias + ReLU
    # Single-pass LN stats over the real OUT lanes (padded lanes are exact zeros).
    s1 = jnp.sum(y, axis=-1, keepdims=True)
    s2 = jnp.sum(y * y, axis=-1, keepdims=True)
    mean = s1 * inv_out
    var = jnp.maximum(s2 * inv_out - mean * mean, 0.0)       # guard f32 cancellation
    y_hat = (y - mean) * jax.lax.rsqrt(var + LN_EPS)
    o_ref[...] = (y_hat * g_ref[...] + be_ref[...]).astype(o_ref.dtype)


def _linear_relu_ln_kernel_mk(x_ref, w_ref, b_ref, g_ref, be_ref, o_ref, acc_ref, *,
                              inv_out):
    """K-tiled reduction with a resident f32 accumulator (grid = (num_m, num_k))."""
    k = pl.program_id(1)
    part = jnp.dot(x_ref[...], w_ref[...], preferred_element_type=jnp.float32)

    @pl.when(k == 0)
    def _():
        acc_ref[...] = part            # overwrite: no separate zero-init pass

    @pl.when(k > 0)
    def _():
        acc_ref[...] += part

    @pl.when(k == pl.num_programs(1) - 1)
    def _():
        # Epilogue in place on the accumulator (saves a (tm, OUT_P) f32 temp).
        acc_ref[...] = jnp.maximum(acc_ref[...] + b_ref[...], 0.0)
        y = acc_ref[...]
        s1 = jnp.sum(y, axis=-1, keepdims=True)
        s2 = jnp.sum(y * y, axis=-1, keepdims=True)
        mean = s1 * inv_out
        var = jnp.maximum(s2 * inv_out - mean * mean, 0.0)
        y_hat = (y - mean) * jax.lax.rsqrt(var + LN_EPS)
        o_ref[...] = (y_hat * g_ref[...] + be_ref[...]).astype(o_ref.dtype)


# ----------------------------------------------------------------------------- wrapper
def linear_layer_pallas(x, w, b, gamma, beta, *, tm=512, tk=512,
                        compute_dtype=jnp.bfloat16, out_dtype=None,
                        _force_tiled=False):
    """Fused Linear -> ReLU -> LayerNorm.

    x: [B, S, IN]; w: [IN, OUT] (transposed vs torch's [OUT, IN]); b/gamma/beta: [OUT].
    compute_dtype: MXU input dtype (default bf16 ~2x MXU throughput on v6e/v7x and half
    the x/w DMA + VMEM footprint).  Accumulation and the ReLU/LayerNorm epilogue always
    run in float32; pass compute_dtype=jnp.float32 for a bit-accurate f32 path.
    Returns [B, S, OUT] in out_dtype (default x.dtype).
    """
    # Note: an int8 (v5e/v6e) / fp8 (v7x) weight path with per-channel scales folded
    # into the f32 epilogue would double MXU throughput again; out of scope here.
    B, S, IN = x.shape
    OUT = w.shape[1]
    M = B * S
    out_dtype = x.dtype if out_dtype is None else out_dtype
    compute_dtype = jnp.dtype(compute_dtype)

    bytes_c = compute_dtype.itemsize
    bytes_o = jnp.dtype(out_dtype).itemsize
    pack = {4: 8, 2: 16, 1: 32}.get(bytes_c, 8)      # sublane packing of compute dtype

    OUT_P = _round_up(OUT, 128)                      # lane-dense (unmasked) stores
    vec_bytes = 3 * OUT_P * 4                        # bias / gamma / beta (f32)

    budget = _vmem_budget_bytes()
    tile_budget = int(budget * 0.85)                 # slack for compiler scratch

    # ---- row tile (tm) --------------------------------------------------------------
    M_pack = _round_up(M, pack)
    tm_cap = min(_round_up(tm, pack), M_pack)
    # Megacore: keep >= 2 row tiles whenever there is enough work so the "parallel"
    # axis can be split across v7x's two TensorCores (one extra ~0.35us grid step on
    # single-TC v5e/v6e -- negligible).
    if M_pack >= 2 * pack:
        tm_cap = min(tm_cap, _round_up(-(-M_pack // 2), pack))

    # ---- resident-weight decision (num_k == 1) ----------------------------------------
    def _resident_fp(tm_):
        n_m = _round_up(M_pack, tm_) // tm_
        nbuf = 2 if n_m > 1 else 1
        return (IN * OUT_P * bytes_c              # whole weight, single-buffered
                + nbuf * tm_ * IN * bytes_c       # x tiles
                + nbuf * tm_ * OUT_P * bytes_o    # output tiles
                + 2 * tm_ * OUT_P * 4             # f32 matmul result + LN temps
                + vec_bytes)

    tm_floor = max(pack, min(tm_cap, 128))
    resident_tm = None
    t = tm_cap
    while True:
        if _resident_fp(t) <= tile_budget:
            resident_tm = t
            break
        if t <= tm_floor:
            break
        t = max(tm_floor, _round_up(t // 2, pack))

    # ---- shared parameter prep (zero padding is REQUIRED for the LN stats) -----------
    pad_out = (0, OUT_P - OUT)
    b2 = jnp.pad(b.astype(jnp.float32), pad_out).reshape(1, OUT_P)
    g2 = jnp.pad(gamma.astype(jnp.float32), pad_out).reshape(1, OUT_P)
    be2 = jnp.pad(beta.astype(jnp.float32), pad_out).reshape(1, OUT_P)

    single = pl.Buffered(buffer_count=1)

    if resident_tm is not None and not _force_tiled:
        # ---------------- resident-weight path: grid = (num_m,), no K padding ----------
        tm_sel = resident_tm
        M_P = _round_up(M_pack, tm_sel)
        num_m = M_P // tm_sel

        x2 = x.reshape(M, IN).astype(compute_dtype)
        if M_P != M:
            x2 = jnp.pad(x2, ((0, M_P - M), (0, 0)))
        w2 = w.astype(compute_dtype)
        if OUT_P != OUT:
            w2 = jnp.pad(w2, ((0, 0), (0, OUT_P - OUT)))

        if num_m == 1:
            x_spec = pl.BlockSpec((tm_sel, IN), lambda i: (i, 0), pipeline_mode=single)
        else:
            x_spec = pl.BlockSpec((tm_sel, IN), lambda i: (i, 0))
        w_spec = pl.BlockSpec((IN, OUT_P), lambda i: (0, 0), pipeline_mode=single)
        vec_spec = lambda: pl.BlockSpec((1, OUT_P), lambda i: (0, 0),
                                        pipeline_mode=single)
        out_spec = pl.BlockSpec((tm_sel, OUT_P), lambda i: (i, 0))

        kernel = functools.partial(_linear_relu_ln_kernel_1k, inv_out=1.0 / OUT)
        out = pl.pallas_call(
            kernel,
            out_shape=jax.ShapeDtypeStruct((M_P, OUT_P), out_dtype),
            grid_spec=pltpu.PrefetchScalarGridSpec(
                num_scalar_prefetch=0,
                grid=(num_m,),
                in_specs=[x_spec, w_spec, vec_spec(), vec_spec(), vec_spec()],
                out_specs=out_spec,
                scratch_shapes=[],                      # no accumulator needed
            ),
            compiler_params=pltpu.CompilerParams(
                dimension_semantics=("parallel",),
                vmem_limit_bytes=budget,
            ),
        )(x2, w2, b2, g2, be2)

    else:
        # ---------------- K-tiled path: grid = (num_m, num_k), reduction axis last -----
        IN_P = _round_up(IN, 128)
        tk_sel = _largest_divisor_tile(IN_P, max(128, _round_up(tk, 128)), 128)
        tm_sel = tm_cap

        def _tiled_fp(tm_, tk_):
            return (2 * tk_ * OUT_P * bytes_c          # double-buffered weight tiles
                    + 2 * tm_ * tk_ * bytes_c          # double-buffered x tiles
                    + 2 * tm_ * OUT_P * bytes_o        # double-buffered output tiles
                    + 2 * tm_ * OUT_P * 4              # acc scratch + epilogue temps
                    + vec_bytes)

        # Large-OUT guard (matters on v7x's 64 MiB VMEM): shrink tm, then tk.
        while _tiled_fp(tm_sel, tk_sel) > tile_budget:
            if tm_sel > 256:
                tm_sel = max(256, _round_up(tm_sel // 2, pack))
            elif tk_sel > 128:
                tk_sel = _largest_divisor_tile(IN_P, max(128, tk_sel // 2), 128)
            elif tm_sel > pack:
                tm_sel = max(pack, _round_up(tm_sel // 2, pack))
            else:
                break

        M_P = _round_up(M_pack, tm_sel)
        num_m = M_P // tm_sel
        num_k = IN_P // tk_sel

        x2 = x.reshape(M, IN).astype(compute_dtype)
        if (M_P, IN_P) != (M, IN):
            x2 = jnp.pad(x2, ((0, M_P - M), (0, IN_P - IN)))
        w2 = w.astype(compute_dtype)
        if (IN_P, OUT_P) != (IN, OUT):
            w2 = jnp.pad(w2, ((0, IN_P - IN), (0, OUT_P - OUT)))

        x_spec = pl.BlockSpec((tm_sel, tk_sel), lambda i, k: (i, k))
        w_spec = pl.BlockSpec((tk_sel, OUT_P), lambda i, k: (k, 0))
        vec_spec = lambda: pl.BlockSpec((1, OUT_P), lambda i, k: (0, 0),
                                        pipeline_mode=single)
        out_spec = pl.BlockSpec((tm_sel, OUT_P), lambda i, k: (i, 0))

        kernel = functools.partial(_linear_relu_ln_kernel_mk, inv_out=1.0 / OUT)
        out = pl.pallas_call(
            kernel,
            out_shape=jax.ShapeDtypeStruct((M_P, OUT_P), out_dtype),
            grid_spec=pltpu.PrefetchScalarGridSpec(
                num_scalar_prefetch=0,
                grid=(num_m, num_k),                    # reduction axis last
                in_specs=[x_spec, w_spec, vec_spec(), vec_spec(), vec_spec()],
                out_specs=out_spec,
                scratch_shapes=[pltpu.VMEM((tm_sel, OUT_P), jnp.float32)],
            ),
            compiler_params=pltpu.CompilerParams(
                dimension_semantics=("parallel", "arbitrary"),
                vmem_limit_bytes=budget,
            ),
        )(x2, w2, b2, g2, be2)

    return out[:M, :OUT].reshape(B, S, OUT)


# ----------------------------------------------------------------------------- reference
def reference(x, w, b, gamma, beta):
    y = jnp.einsum("bsi,io->bso", x, w) + b
    y = jnp.maximum(y, 0.0)
    mean = jnp.mean(y, axis=-1, keepdims=True)
    var = jnp.mean((y - mean) ** 2, axis=-1, keepdims=True)
    return (y - mean) * jax.lax.rsqrt(var + LN_EPS) * gamma + beta


if __name__ == "__main__":
    key = jax.random.PRNGKey(0)

    # ---- small shape implied by the module (batch=2, seq=8, in=32, out=64) ----------
    B, S, IN, OUT = 2, 8, 32, 64
    kx, kw, kb, kx2, kw2, kb2 = jax.random.split(key, 6)
    x = jax.random.normal(kx, (B, S, IN), dtype=jnp.float32)

    # torch stores weight as [OUT, IN]; we keep the kernel-friendly [IN, OUT] layout.
    bound = 1.0 / (IN ** 0.5)
    w = jax.random.uniform(kw, (IN, OUT), minval=-bound, maxval=bound, dtype=jnp.float32)
    b = jax.random.uniform(kb, (OUT,), minval=-bound, maxval=bound, dtype=jnp.float32)
    gamma = jnp.ones((OUT,), dtype=jnp.float32)   # nn.LayerNorm default weight
    beta = jnp.zeros((OUT,), dtype=jnp.float32)   # nn.LayerNorm default bias

    ref = reference(x, w, b, gamma, beta)

    # f32 MXU path (tight check) -- exercises the resident-weight kernel.
    out_f32 = jax.block_until_ready(
        linear_layer_pallas(x, w, b, gamma, beta, compute_dtype=jnp.float32))
    assert out_f32.shape == (B, S, OUT)
    assert jnp.allclose(out_f32, ref, atol=1e-4, rtol=1e-4), "f32 kernel mismatch"

    # Default path: bf16 MXU inputs + f32 accumulate/epilogue (looser tolerance).
    out_bf16 = jax.block_until_ready(linear_layer_pallas(x, w, b, gamma, beta))
    assert out_bf16.shape == (B, S, OUT)
    assert jnp.allclose(out_bf16, ref, atol=5e-2, rtol=5e-2), "bf16 kernel mismatch"

    # ---- medium shape, forced K-tiled path (exercises the multi-k kernel) -----------
    B2, S2, IN2, OUT2 = 2, 64, 256, 256
    x_m = jax.random.normal(kx2, (B2, S2, IN2), dtype=jnp.float32)
    bound2 = 1.0 / (IN2 ** 0.5)
    w_m = jax.random.uniform(kw2, (IN2, OUT2), minval=-bound2, maxval=bound2,
                             dtype=jnp.float32)
    b_m = jax.random.uniform(kb2, (OUT2,), minval=-bound2, maxval=bound2,
                             dtype=jnp.float32)
    g_m = jnp.ones((OUT2,), jnp.float32)
    be_m = jnp.zeros((OUT2,), jnp.float32)

    ref_m = reference(x_m, w_m, b_m, g_m, be_m)
    out_m = jax.block_until_ready(
        linear_layer_pallas(x_m, w_m, b_m, g_m, be_m, tk=128,
                            compute_dtype=jnp.float32, _force_tiled=True))
    assert out_m.shape == (B2, S2, OUT2)
    assert jnp.allclose(out_m, ref_m, atol=1e-3, rtol=1e-3), "tiled kernel mismatch"

    print("KERNEL_OK")
</pallas_src>

<mosaic_0001>
module attributes {stable_mosaic.version = 11 : i64} {
  func.func @_linear_relu_ln_kernel_1k(%arg0: i32, %arg1: memref<8x32xf32, #tpu.memory_space<vmem>>, %arg2: memref<32x128xf32, #tpu.memory_space<vmem>>, %arg3: memref<1x128xf32, #tpu.memory_space<vmem>>, %arg4: memref<1x128xf32, #tpu.memory_space<vmem>>, %arg5: memref<1x128xf32, #tpu.memory_space<vmem>>, %arg6: memref<8x128xf32, #tpu.memory_space<vmem>>) attributes {dimension_semantics = [#tpu.dimension_semantics<parallel>], iteration_bounds = array<i64: 2>, scalar_prefetch = 0 : i64, scratch_operands = 0 : i64, tpu.core_type = #tpu.core_type<tc>, window_params = [{transform_indices = @transform_0, window_bounds = array<i64: 8, 32>}, {pipeline_mode = #tpu.pipeline_mode<synchronous>, transform_indices = @transform_1, window_bounds = array<i64: 32, 128>}, {pipeline_mode = #tpu.pipeline_mode<synchronous>, transform_indices = @transform_2, window_bounds = array<i64: 1, 128>}, {pipeline_mode = #tpu.pipeline_mode<synchronous>, transform_indices = @transform_3, window_bounds = array<i64: 1, 128>}, {pipeline_mode = #tpu.pipeline_mode<synchronous>, transform_indices = @transform_4, window_bounds = array<i64: 1, 128>}, {transform_indices = @transform_5, window_bounds = array<i64: 8, 128>}]} {
    %c0 = arith.constant 0 : index
    %c0_0 = arith.constant 0 : index
    %0 = vector.load %arg1[%c0, %c0_0] : memref<8x32xf32, #tpu.memory_space<vmem>>, vector<8x32xf32>
    %c0_1 = arith.constant 0 : index
    %c0_2 = arith.constant 0 : index
    %1 = vector.load %arg2[%c0_1, %c0_2] : memref<32x128xf32, #tpu.memory_space<vmem>>, vector<32x128xf32>
    %cst = arith.constant dense<0.000000e+00> : vector<8x128xf32>
    %2 = tpu.matmul %0, %1, %cst {dimension_numbers = #tpu.dot_dimension_numbers<[1], [0], [0], [1], [0, 0, 1, 1], [], []>} : vector<8x32xf32>, vector<32x128xf32>, vector<8x128xf32> -> vector<8x128xf32>
    %c0_3 = arith.constant 0 : index
    %c0_4 = arith.constant 0 : index
    %3 = vector.load %arg3[%c0_3, %c0_4] : memref<1x128xf32, #tpu.memory_space<vmem>>, vector<1x128xf32>
    %4 = vector.broadcast %3 : vector<1x128xf32> to vector<8x128xf32>
    %5 = arith.addf %2, %4 : vector<8x128xf32>
    %cst_5 = arith.constant 0.000000e+00 : f32
    %6 = vector.broadcast %cst_5 : f32 to vector<8x128xf32>
    %7 = arith.maximumf %5, %6 : vector<8x128xf32>
    %cst_6 = arith.constant dense<0.000000e+00> : vector<8xf32>
    %8 = vector.multi_reduction <add>, %7, %cst_6 [1] : vector<8x128xf32> to vector<8xf32>
    %9 = vector.shape_cast %8 : vector<8xf32> to vector<8x1xf32>
    %10 = arith.mulf %7, %7 : vector<8x128xf32>
    %cst_7 = arith.constant dense<0.000000e+00> : vector<8xf32>
    %11 = vector.multi_reduction <add>, %10, %cst_7 [1] : vector<8x128xf32> to vector<8xf32>
    %12 = vector.shape_cast %11 : vector<8xf32> to vector<8x1xf32>
    %cst_8 = arith.constant 1.562500e-02 : f32
    %13 = vector.broadcast %cst_8 : f32 to vector<8x1xf32>
    %14 = arith.mulf %9, %13 : vector<8x1xf32>
    %cst_9 = arith.constant 1.562500e-02 : f32
    %15 = vector.broadcast %cst_9 : f32 to vector<8x1xf32>
    %16 = arith.mulf %12, %15 : vector<8x1xf32>
    %17 = arith.mulf %14, %14 : vector<8x1xf32>
    %18 = arith.subf %16, %17 : vector<8x1xf32>
    %cst_10 = arith.constant 0.000000e+00 : f32
    %19 = vector.broadcast %cst_10 : f32 to vector<8x1xf32>
    %20 = arith.maximumf %18, %19 : vector<8x1xf32>
    %21 = vector.broadcast %14 : vector<8x1xf32> to vector<8x128xf32>
    %22 = arith.subf %7, %21 : vector<8x128xf32>
    %cst_11 = arith.constant 9.99999974E-6 : f32
    %23 = vector.broadcast %cst_11 : f32 to vector<8x1xf32>
    %24 = arith.addf %20, %23 : vector<8x1xf32>
    %25 = math.rsqrt %24 : vector<8x1xf32>
    %26 = vector.broadcast %25 : vector<8x1xf32> to vector<8x128xf32>
    %27 = arith.mulf %22, %26 : vector<8x128xf32>
    %c0_12 = arith.constant 0 : index
    %c0_13 = arith.constant 0 : index
    %28 = vector.load %arg4[%c0_12, %c0_13] : memref<1x128xf32, #tpu.memory_space<vmem>>, vector<1x128xf32>
    %29 = vector.broadcast %28 : vector<1x128xf32> to vector<8x128xf32>
    %30 = arith.mulf %27, %29 : vector<8x128xf32>
    %c0_14 = arith.constant 0 : index
    %c0_15 = arith.constant 0 : index
    %31 = vector.load %arg5[%c0_14, %c0_15] : memref<1x128xf32, #tpu.memory_space<vmem>>, vector<1x128xf32>
    %32 = vector.broadcast %31 : vector<1x128xf32> to vector<8x128xf32>
    %33 = arith.addf %30, %32 : vector<8x128xf32>
    %c0_16 = arith.constant 0 : index
    %c0_17 = arith.constant 0 : index
    %34 = vector.load %arg6[%c0_16, %c0_17] : memref<8x128xf32, #tpu.memory_space<vmem>>, vector<8x128xf32>
    tpu.vector_store %arg6[%c0_16, %c0_17], %33 {strides = array<i32>} : memref<8x128xf32, #tpu.memory_space<vmem>>, vector<8x128xf32>,
    return
  }
  func.func @transform_0(%arg0: i32) -> (i32, i32) {
    %c0_i32 = arith.constant 0 : i32
    %c0_i32_0 = arith.constant 0 : i32
    return %arg0, %c0_i32 : i32, i32
  }
  func.func @transform_1(%arg0: i32) -> (i32, i32) {
    %c0_i32 = arith.constant 0 : i32
    %c0_i32_0 = arith.constant 0 : i32
    %c0_i32_1 = arith.constant 0 : i32
    return %c0_i32, %c0_i32_0 : i32, i32
  }
  func.func @transform_2(%arg0: i32) -> (i32, i32) {
    %c0_i32 = arith.constant 0 : i32
    %c0_i32_0 = arith.constant 0 : i32
    %c0_i32_1 = arith.constant 0 : i32
    return %c0_i32, %c0_i32_0 : i32, i32
  }
  func.func @transform_3(%arg0: i32) -> (i32, i32) {
    %c0_i32 = arith.constant 0 : i32
    %c0_i32_0 = arith.constant 0 : i32
    %c0_i32_1 = arith.constant 0 : i32
    return %c0_i32, %c0_i32_0 : i32, i32
  }
  func.func @transform_4(%arg0: i32) -> (i32, i32) {
    %c0_i32 = arith.constant 0 : i32
    %c0_i32_0 = arith.constant 0 : i32
    %c0_i32_1 = arith.constant 0 : i32
    return %c0_i32, %c0_i32_0 : i32, i32
  }
  func.func @transform_5(%arg0: i32) -> (i32, i32) {
    %c0_i32 = arith.constant 0 : i32
    %c0_i32_0 = arith.constant 0 : i32
    return %arg0, %c0_i32 : i32, i32
  }
}

</mosaic_0001>

<llo_original>
// kernel: tpu_custom_call.1
$region0: #{tpu_custom_call.1}
  #allocation0 [shape = 'u32[]', space=smem, size = 0x4, offset = 0x4, fixed_abs, tag = 'smem constant byte address 0x4 - core index']
  #allocation1 [shape = 'u32[144,128]{1,0:T(1,128)}', space=vmem, size = 0x12000, scoped, tag = 'internal scratch']
  %s0 = inlined_call_operand.hbm [shape: f32[16,32], index: 0, kind: input, shape index: {}]
  %s1 = inlined_call_operand.hbm [shape: f32[32,128], index: 1, kind: input, shape index: {}]
  %s2 = inlined_call_operand.vmem [shape: f32[1,128], index: 2, kind: input, shape index: {}]
  %s3 = inlined_call_operand.vmem [shape: f32[1,128], index: 3, kind: input, shape index: {}]
  %s4 = inlined_call_operand.vmem [shape: f32[1,128], index: 4, kind: input, shape index: {}]
  %s5 = inlined_call_operand.hbm [shape: f32[16,128], index: 5, kind: output, shape index: {}]
  %s6 = sld [smem:[#allocation0]]
  $region61: #{tpu_custom_call.1} parent=0
    _
  %s8 = ssub.s32 1, %s6
  %s9 = scalar_select 0, %s8, %s6
  $region1: #{tpu_custom_call.1} parent=0
    #allocation2 [shape = 'u8[8192]{0}', space=vmem, size = 0x2000, scoped, tag = 'input window, operand 0']
    #allocation3 [shape = 's32[2]{0}', space=sflag, size = 0x8, scoped, tag = 'scoped memory for tpu_custom_call.1']
    #allocation4 [shape = 's32[2]{0}', space=sflag, size = 0x8, scoped, tag = 'scoped memory for tpu_custom_call.1']
    #allocation5 [shape = 'u8[16384]{0}', space=vmem, size = 0x4000, scoped, tag = 'input window, operand 1, single buffered']
    #allocation6 [shape = 's32[1]{0}', space=sflag, size = 0x4, scoped, tag = 'scoped memory for tpu_custom_call.1']
    #allocation7 [shape = 'u8[8192]{0}', space=vmem, size = 0x2000, scoped, tag = 'output window, operand 0']
    %10 = vsyncpa [#allocation3], 0
    %s11 = scalar_lea.sflag [#allocation3], 1
    %12 = vsyncpa %s11, 0
    %13 = vsyncpa [#allocation6], 0
    %14 = vsyncpa [#allocation4], 0
    %s15 = scalar_lea.sflag [#allocation4], 1
    %16 = vsyncpa %s15, 0
    loop: start=0, step=1, limit=4
    $region2: #{tpu_custom_call.1} parent=1 // loop_pre_header
      _
    $region3: #{tpu_custom_call.1} parent=1 // loop_header
      %s18 = sphi 0, %s22
      %p19 = scmp.ge.s32.totalorder %s18, 4
      %s28 = sphi 0, %s30
      %s31 = sphi 0, %s28
      %s32 = sphi 0, %s31
      %s48 = sphi 0, %s32
      %s52 = sphi 0, %s52
      %s54 = sphi 0, %s52
      %s55 = sphi 0, %s54
      %s69 = sphi 0, %s55
      %s73 = sphi 0, %s73
      %s75 = sphi 0, %s73
      %s76 = sphi 0, %s75
      %s90 = sphi 0, %s76
      %s94 = sphi 0, %s94
      %s96 = sphi 0, %s94
      %s97 = sphi 0, %s96
      %s111 = sphi 0, %s97
      %s115 = sphi 0, %s115
      %s117 = sphi 0, %s115
      %s118 = sphi 0, %s117
      %s132 = sphi 0, %s118
      %s138 = sphi 0, %s140
      %s141 = sphi 0, %s138
      %s142 = sphi 0, %s141
      %s158 = sphi 0, %s142
    $region4: #{tpu_custom_call.1} parent=1 // loop_header_branch
      %21 = sbr.rel (%p19) target = $region8
    $region5: #{tpu_custom_call.1} parent=1 // loop_body
      %s23 = ssub.s32 %s18, 1
      %s24 = ssub.s32 %s18, 2
      %s25 = sadd.s32 %s18, 1
      %s26 = ssub.s32 %s18, %s25
      %p27 = scmp.eq.s32.totalorder %s26, 0
      %s29 = sadd.s32 %s28, 1
      %s30 = scalar_select %p27, %s28, %s29
      %p33 = pneg %p27
      %p34 = scmp.eq.s32.totalorder %s18, 1
      %p35 = por %p33, %p34
      %p36 = scmp.ne.s32.totalorder %s28, %s31
      %p37 = scmp.eq.s32.totalorder %s18, 0
      %p38 = por %p36, %p37
      %p39 = scmp.ne.s32.totalorder %s28, %s31
      %p40 = scmp.eq.s32.totalorder %s23, 1
      %p41 = por %p39, %p40
      %p42 = scmp.ne.s32.totalorder %s31, %s32
      %p43 = scmp.eq.s32.totalorder %s23, 0
      %p44 = por %p42, %p43
      %p45 = scmp.ne.s32.totalorder %s31, %s32
      %p46 = scmp.eq.s32.totalorder %s24, 1
      %p47 = por %p45, %p46
      %p49 = scmp.ne.s32.totalorder %s32, %s48
      %p50 = scmp.eq.s32.totalorder %s24, 0
      %p51 = por %p49, %p50
      %s53 = sadd.s32 %s52, 1
      %p56 = scmp.eq.s32.totalorder %s18, 1
      %p57 = scmp.ne.s32.totalorder %s52, %s54
      %p58 = scmp.eq.s32.totalorder %s18, 0
      %p59 = por %p57, %p58
      %p60 = scmp.ne.s32.totalorder %s52, %s54
      %p61 = scmp.eq.s32.totalorder %s23, 1
      %p62 = por %p60, %p61
      %p63 = scmp.ne.s32.totalorder %s54, %s55
      %p64 = scmp.eq.s32.totalorder %s23, 0
      %p65 = por %p63, %p64
      %p66 = scmp.ne.s32.totalorder %s54, %s55
      %p67 = scmp.eq.s32.totalorder %s24, 1
      %p68 = por %p66, %p67
      %p70 = scmp.ne.s32.totalorder %s55, %s69
      %p71 = scmp.eq.s32.totalorder %s24, 0
      %p72 = por %p70, %p71
      %s74 = sadd.s32 %s73, 1
      %p77 = scmp.eq.s32.totalorder %s18, 1
      %p78 = scmp.ne.s32.totalorder %s73, %s75
      %p79 = scmp.eq.s32.totalorder %s18, 0
      %p80 = por %p78, %p79
      %p81 = scmp.ne.s32.totalorder %s73, %s75
      %p82 = scmp.eq.s32.totalorder %s23, 1
      %p83 = por %p81, %p82
      %p84 = scmp.ne.s32.totalorder %s75, %s76
      %p85 = scmp.eq.s32.totalorder %s23, 0
      %p86 = por %p84, %p85
      %p87 = scmp.ne.s32.totalorder %s75, %s76
      %p88 = scmp.eq.s32.totalorder %s24, 1
      %p89 = por %p87, %p88
      %p91 = scmp.ne.s32.totalorder %s76, %s90
      %p92 = scmp.eq.s32.totalorder %s24, 0
      %p93 = por %p91, %p92
      %s95 = sadd.s32 %s94, 1
      %p98 = scmp.eq.s32.totalorder %s18, 1
      %p99 = scmp.ne.s32.totalorder %s94, %s96
      %p100 = scmp.eq.s32.totalorder %s18, 0
      %p101 = por %p99, %p100
      %p102 = scmp.ne.s32.totalorder %s94, %s96
      %p103 = scmp.eq.s32.totalorder %s23, 1
      %p104 = por %p102, %p103
      %p105 = scmp.ne.s32.totalorder %s96, %s97
      %p106 = scmp.eq.s32.totalorder %s23, 0
      %p107 = por %p105, %p106
      %p108 = scmp.ne.s32.totalorder %s96, %s97
      %p109 = scmp.eq.s32.totalorder %s24, 1
      %p110 = por %p108, %p109
      %p112 = scmp.ne.s32.totalorder %s97, %s111
      %p113 = scmp.eq.s32.totalorder %s24, 0
      %p114 = por %p112, %p113
      %s116 = sadd.s32 %s115, 1
      %p119 = scmp.eq.s32.totalorder %s18, 1
      %p120 = scmp.ne.s32.totalorder %s115, %s117
      %p121 = scmp.eq.s32.totalorder %s18, 0
      %p122 = por %p120, %p121
      %p123 = scmp.ne.s32.totalorder %s115, %s117
      %p124 = scmp.eq.s32.totalorder %s23, 1
      %p125 = por %p123, %p124
      %p126 = scmp.ne.s32.totalorder %s117, %s118
      %p127 = scmp.eq.s32.totalorder %s23, 0
      %p128 = por %p126, %p127
      %p129 = scmp.ne.s32.totalorder %s117, %s118
      %p130 = scmp.eq.s32.totalorder %s24, 1
      %p131 = por %p129, %p130
      %p133 = scmp.ne.s32.totalorder %s118, %s132
      %p134 = scmp.eq.s32.totalorder %s24, 0
      %p135 = por %p133, %p134
      %s136 = ssub.s32 %s18, %s25
      %p137 = scmp.eq.s32.totalorder %s136, 0
      %s139 = sadd.s32 %s138, 1
      %s140 = scalar_select %p137, %s138, %s139
      %p143 = pneg %p137
      %p144 = scmp.eq.s32.totalorder %s18, 1
      %p145 = por %p143, %p144
      %p146 = scmp.ne.s32.totalorder %s138, %s141
      %p147 = scmp.eq.s32.totalorder %s18, 0
      %p148 = por %p146, %p147
      %p149 = scmp.ne.s32.totalorder %s138, %s141
      %p150 = scmp.eq.s32.totalorder %s23, 1
      %p151 = por %p149, %p150
      %p152 = scmp.ne.s32.totalorder %s141, %s142
      %p153 = scmp.eq.s32.totalorder %s23, 0
      %p154 = por %p152, %p153
      %p155 = scmp.ne.s32.totalorder %s141, %s142
      %p156 = scmp.eq.s32.totalorder %s24, 1
      %p157 = por %p155, %p156
      %p159 = scmp.ne.s32.totalorder %s142, %s158
      %p160 = scmp.eq.s32.totalorder %s24, 0
      %p161 = por %p159, %p160
      %p162 = scmp.le.s32.totalorder 1, %s18
      %p163 = scmp.lt.s32.totalorder %s18, 3
      %p164 = pnand %p162, %p163
      %p165 = pneg %p164
      // Predicated region
      $region9: #{tpu_custom_call.1} parent=5 // pred_check
        _
      $region10: #{tpu_custom_call.1} parent=5 // pred_check_branch
        %167 = sbr.rel (%p164) target = $region12
      $region11: #{tpu_custom_call.1} parent=5 // pred_region
        %s168 = ssub.s32 %s18, 1
        // Predicated region
        $region13: #{tpu_custom_call.1} parent=11 // pred_check
          %p169 = pneg %p65
        $region14: #{tpu_custom_call.1} parent=11 // pred_check_branch
          %171 = sbr.rel (%p169) target = $region16
        $region15: #{tpu_custom_call.1} parent=11 // pred_region
          %s173 = ssub.s32 512, 512
          %174 = vsyncadd [#allocation6], %s173
          %s175 = sshll.u32 [#allocation5], 4
          %s176 = int_to_ptr.vmem [resolvable:$true] %s175
          %181 = dma.hbm_to_vmem [thread:$0]  %s1, 512, %s176, [#allocation6], 128, 128, 8
        $region16: #{tpu_custom_call.1} parent=11 // pred_fallthru
          _
        // Predicated region
        $region17: #{tpu_custom_call.1} parent=11 // pred_check
          %p182 = pneg %p86
        $region18: #{tpu_custom_call.1} parent=11 // pred_check_branch
          %184 = sbr.rel (%p182) target = $region20
        $region19: #{tpu_custom_call.1} parent=11 // pred_region
          _
        $region20: #{tpu_custom_call.1} parent=11 // pred_fallthru
          _
        // Predicated region
        $region21: #{tpu_custom_call.1} parent=11 // pred_check
          %p185 = pneg %p107
        $region22: #{tpu_custom_call.1} parent=11 // pred_check_branch
          %187 = sbr.rel (%p185) target = $region24
        $region23: #{tpu_custom_call.1} parent=11 // pred_region
          _
        $region24: #{tpu_custom_call.1} parent=11 // pred_fallthru
          _
        // Predicated region
        $region25: #{tpu_custom_call.1} parent=11 // pred_check
          %p188 = pneg %p128
        $region26: #{tpu_custom_call.1} parent=11 // pred_check_branch
          %190 = sbr.rel (%p188) target = $region28
        $region27: #{tpu_custom_call.1} parent=11 // pred_region
          _
        $region28: #{tpu_custom_call.1} parent=11 // pred_fallthru
          _
      $region12: #{tpu_custom_call.1} parent=5 // pred_fallthru
        _
      %p191 = scmp.lt.s32.totalorder %s18, 2
      // Predicated region
      $region29: #{tpu_custom_call.1} parent=5 // pred_check
        %p192 = pneg %p191
      $region30: #{tpu_custom_call.1} parent=5 // pred_check_branch
        %194 = sbr.rel (%p192) target = $region32
      $region31: #{tpu_custom_call.1} parent=5 // pred_region
        // Predicated region
        $region33: #{tpu_custom_call.1} parent=31 // pred_check
          %p195 = pneg %p38
        $region34: #{tpu_custom_call.1} parent=31 // pred_check_branch
          %197 = sbr.rel (%p195) target = $region36
        $region35: #{tpu_custom_call.1} parent=31 // pred_region
          %s198 = sand.u32 %s28, 1
          %s199 = scalar_lea.sflag [#allocation3], %s198
          %s200 = sand.u32 %s28, 1
          %s201 = smul.addr %s200, 8
          %s202 = scalar_lea.vmem [#allocation2], %s201
          %s204 = ssub.s32 128, 128
          %205 = vsyncadd %s199, %s204
          %s206 = smul.addr %s18, 128
          %s207 = scalar_lea.hbm %s0, %s206
          %s209 = sshll.u32 %s202, 4
          %s210 = int_to_ptr.vmem [resolvable:$true] %s209
          %212 = dma.hbm_to_vmem [thread:$0]  %s207, 128, %s210, %s199
        $region36: #{tpu_custom_call.1} parent=31 // pred_fallthru
          _
      $region32: #{tpu_custom_call.1} parent=5 // pred_fallthru
        _
      %p213 = scmp.le.s32.totalorder 1, %s18
      %p214 = scmp.lt.s32.totalorder %s18, 3
      %p215 = pnand %p213, %p214
      %p216 = pneg %p215
      // Predicated region
      $region37: #{tpu_custom_call.1} parent=5 // pred_check
        _
      $region38: #{tpu_custom_call.1} parent=5 // pred_check_branch
        %218 = sbr.rel (%p215) target = $region40
      $region39: #{tpu_custom_call.1} parent=5 // pred_region
        %s219 = ssub.s32 %s18, 1
        %s220 = sand.u32 %s31, 1
        %s221 = scalar_lea.sflag [#allocation3], %s220
        %s222 = sand.u32 %s31, 1
        %s223 = smul.addr %s222, 8
        %s224 = scalar_lea.vmem [#allocation2], %s223
        // Predicated region
        $region41: #{tpu_custom_call.1} parent=39 // pred_check
          %p225 = pneg %p44
        $region42: #{tpu_custom_call.1} parent=39 // pred_check_branch
          %227 = sbr.rel (%p225) target = $region44
        $region43: #{tpu_custom_call.1} parent=39 // pred_region
          %228 = dma.done %s221, 128
        $region44: #{tpu_custom_call.1} parent=39 // pred_fallthru
          _
        // Predicated region
        $region45: #{tpu_custom_call.1} parent=39 // pred_check
          %p229 = pneg %p65
        $region46: #{tpu_custom_call.1} parent=39 // pred_check_branch
          %231 = sbr.rel (%p229) target = $region48
        $region47: #{tpu_custom_call.1} parent=39 // pred_region
          %232 = dma.done [#allocation6], 512
        $region48: #{tpu_custom_call.1} parent=39 // pred_fallthru
          _
        %s233 = sand.u32 %s31, 1
        %s234 = scalar_lea.sflag [#allocation3], %s233
        %s235 = sand.u32 %s31, 1
        %s236 = smul.addr %s235, 8
        %s237 = scalar_lea.vmem [#allocation2], %s236
        %p238 = pneg %p44
        %p239 = pneg %p41
        %p240 = pneg %p65
        %p241 = pneg %p62
        %p242 = pneg %p86
        %p243 = pneg %p83
        %p244 = pneg %p107
        %p245 = pneg %p104
        %p246 = pneg %p128
        %p247 = pneg %p125
        %p248 = pneg %p154
        %p249 = pneg %p151
        %s250 = sand.u32 %s141, 1
        %s251 = scalar_lea.sflag [#allocation4], %s250
        %s252 = sand.u32 %s141, 1
        %s253 = smul.addr %s252, 8
        %s254 = scalar_lea.vmem [#allocation7], %s253
        %v255 = vld [vmem:[%s224] sm:$0xff]
        %v256 = vld [vmem:[#allocation5] sm:$0xff]
        %v257 = vld [vmem:[#allocation5 + $0x8] sm:$0xff]
        %v258 = vld [vmem:[#allocation5 + $0x10] sm:$0xff]
        %v259 = vld [vmem:[#allocation5 + $0x18] sm:$0xff]
        %v260 = vld [vmem:[%s2] sm:$0x1]
        %v262 = vlaneseq
        %v263 = vshrl.u32 %v262, 7
        %v264 = vsub.s32 0, %v263
        %v265 = vrot.slane %v260, %v264
        %vm267 = vcmask 261120
        %v269 = vsel %vm267, %v255, 0
        %271 = vmatprep.subr.mxu0 0.0
        %272 = vmatpush1.msra.mxu0 %v256
        %273 = vmatprep.subr.mxu0 0.0
        %274 = vmatpush1.msra.mxu0 %v257
        %275 = vmatprep.subr.mxu0 0.0
        %276 = vmatpush1.msra.mxu0 %v258
        %277 = vmatprep.subr.mxu0 0.0
        %278 = vmatpush1.msra.mxu0 %v259
        %279 = vmatprep.subr.mxu0 0.0
        %280 = vmatpush1.msra.mxu0 0.0
        %281 = vmatprep.subr.mxu0 0.0
        %282 = vmatpush1.msra.mxu0 0.0
        %283 = vmatprep.subr.mxu0 0.0
        %284 = vmatpush1.msra.mxu0 0.0
        %285 = vmatprep.subr.mxu0 0.0
        %286 = vmatpush1.msra.mxu0 0.0
        %287 = vmatprep.subr.mxu0 0.0
        %288 = vmatpush1.msra.mxu0 0.0
        %289 = vmatprep.subr.mxu0 0.0
        %290 = vmatpush1.msra.mxu0 0.0
        %291 = vmatprep.subr.mxu0 0.0
        %292 = vmatpush1.msra.mxu0 0.0
        %293 = vmatprep.subr.mxu0 0.0
        %294 = vmatpush1.msra.mxu0 0.0
        %295 = vmatprep.subr.mxu0 0.0
        %296 = vmatpush1.msra.mxu0 0.0
        %297 = vmatprep.subr.mxu0 0.0
        %298 = vmatpush1.msra.mxu0 0.0
        %299 = vmatprep.subr.mxu0 0.0
        %300 = vmatpush1.msra.mxu0 0.0
        %301 = vmatprep.subr.mxu0 0.0
        %302 = vmatpush1.msra.mxu0 0.0
        %303 = vmatprep.subr.mxu0 0.0
        %304 = vmatpush1.msra.mxu0 0.0
        %305 = vmatprep.subr.mxu0 0.0
        %306 = vmatpush1.msra.mxu0 0.0
        %307 = vmatprep.subr.mxu0 0.0
        %308 = vmatpush1.msra.mxu0 0.0
        %309 = vmatprep.subr.mxu0 0.0
        %310 = vmatpush1.msra.mxu0 0.0
        %311 = vmatprep.subr.mxu0 0.0
        %312 = vmatpush1.msra.mxu0 0.0
        %313 = vmatprep.subr.mxu0 0.0
        %314 = vmatpush1.msra.mxu0 0.0
        %315 = vmatprep.subr.mxu0 0.0
        %316 = vmatpush1.msra.mxu0 0.0
        %317 = vmatprep.subr.mxu0 0.0
        %318 = vmatpush1.msra.mxu0 0.0
        %319 = vmatprep.subr.mxu0 0.0
        %320 = vmatpush1.msra.mxu0 0.0
        %321 = vmatprep.subr.mxu0 0.0
        %322 = vmatpush1.msra.mxu0 0.0
        %323 = vmatprep.subr.mxu0 0.0
        %324 = vmatpush1.msra.mxu0 0.0
        %325 = vmatprep.subr.mxu0 0.0
        %326 = vmatpush1.msra.mxu0 0.0
        %327 = vmatprep.subr.mxu0 0.0
        %328 = vmatpush1.msra.mxu0 0.0
        %329 = vmatprep.subr.mxu0 0.0
        %330 = vmatpush1.msra.mxu0 0.0
        %331 = vmatprep.subr.mxu0 0.0
        %332 = vmatpush1.msra.mxu0 0.0
        %333 = vmatprep.subr.mxu0 0.0
        %334 = vmatpush1.msra.mxu0 0.0
        %335 = vmatprep.mubr.f32.mxu0 0.0
        %336 = vmatmul.mubr.f32.gmra.mrb[0].mxu0 %v269
        %v337 = vpop.f32.mrb[0].mxu0
        %v338 = vadd.f32 %v265, %v337
        %v339 = vpop.f32.mrb[0].mxu0
        %340 = vdwg.mxu0
        %v341 = vmax.f32 %v338, 0.0
        %342 = vadd.xlane.f32.xlu0 %v341
        %v343 = vpop.xlane.xlu0 %342
        %v344 = vmul.f32 %v341, %v341
        %345 = vadd.xlane.f32.xlu0 %v344
        %v346 = vpop.xlane.xlu0 %345
        %v347 = vmul.f32 %v343, 0.015625
        %v348 = vmul.f32 %v346, 0.015625
        %v349 = vmul.f32 %v347, %v347
        %v350 = vsub.f32 %v348, %v349
        %v351 = vmax.f32 %v350, 0.0
        %v352 = vsub.f32 %v341, %v347
        %v353 = vadd.f32 %v351, 1e-05
        %v354 = vrsqrt.pop %v353
        %v355 = vmul.f32 %v352, %v354
        %v356 = vld [vmem:[%s3] sm:$0x1]
        %v358 = vlaneseq
        %v359 = vshrl.u32 %v358, 7
        %v360 = vsub.s32 0, %v359
        %v361 = vrot.slane %v356, %v360
        %v363 = vmul.f32 %v355, %v361
        %v364 = vld [vmem:[%s4] sm:$0x1]
        %v366 = vlaneseq
        %v367 = vshrl.u32 %v366, 7
        %v368 = vsub.s32 0, %v367
        %v369 = vrot.slane %v364, %v368
        %v371 = vadd.f32 %v363, %v369
        %372 = vst [vmem:[%s254] sm:$0xff] %v371
        %s373 = sand.u32 %s141, 1
        %s374 = scalar_lea.sflag [#allocation4], %s373
        %s375 = sand.u32 %s141, 1
        %s376 = smul.addr %s375, 8
        %s377 = scalar_lea.vmem [#allocation7], %s376
        // Predicated region
        $region49: #{tpu_custom_call.1} parent=39 // pred_check
          %p378 = pneg %p151
        $region50: #{tpu_custom_call.1} parent=39 // pred_check_branch
          %380 = sbr.rel (%p378) target = $region52
        $region51: #{tpu_custom_call.1} parent=39 // pred_region
          %s382 = ssub.s32 128, 128
          %383 = vsyncadd %s374, %s382
          %s384 = smul.addr %s23, 128
          %s385 = scalar_lea.hbm %s5, %s384
          %s387 = sshll.u32 %s377, 4
          %s388 = int_to_ptr.vmem [resolvable:$true] %s387
          %390 = dma.vmem_to_hbm [thread:$0]  %s388, 128, %s385, %s374
        $region52: #{tpu_custom_call.1} parent=39 // pred_fallthru
          _
      $region40: #{tpu_custom_call.1} parent=5 // pred_fallthru
        _
      %p391 = scmp.le.s32.totalorder 2, %s18
      // Predicated region
      $region53: #{tpu_custom_call.1} parent=5 // pred_check
        %p392 = pneg %p391
      $region54: #{tpu_custom_call.1} parent=5 // pred_check_branch
        %394 = sbr.rel (%p392) target = $region56
      $region55: #{tpu_custom_call.1} parent=5 // pred_region
        %s395 = ssub.s32 %s18, 2
        // Predicated region
        $region57: #{tpu_custom_call.1} parent=55 // pred_check
          %p396 = pneg %p157
        $region58: #{tpu_custom_call.1} parent=55 // pred_check_branch
          %398 = sbr.rel (%p396) target = $region60
        $region59: #{tpu_custom_call.1} parent=55 // pred_region
          %s399 = sand.u32 %s142, 1
          %s400 = scalar_lea.sflag [#allocation4], %s399
          %s401 = sand.u32 %s142, 1
          %s402 = smul.addr %s401, 8
          %s403 = scalar_lea.vmem [#allocation7], %s402
          %404 = dma.done %s400, 128
        $region60: #{tpu_custom_call.1} parent=55 // pred_fallthru
          _
      $region56: #{tpu_custom_call.1} parent=5 // pred_fallthru
        _
    $region6: #{tpu_custom_call.1} parent=1 // loop_footer
      %s22 = sadd.s32 1, %s18
    $region7: #{tpu_custom_call.1} parent=1 // loop_footer_branch
      %17 = sbr.rel target = $region3
    $region8: #{tpu_custom_call.1} parent=1 // loop_exit
      _
    %405 = vsyncpa [#allocation3], 1
    %s406 = scalar_lea.sflag [#allocation3], 1
    %407 = vsyncpa %s406, 1
    %408 = vsyncpa [#allocation6], 1
    %409 = vsyncpa [#allocation4], 1
    %s410 = scalar_lea.sflag [#allocation4], 1
    %411 = vsyncpa %s410, 1

</llo_original>
